<compile_context>
chip_gen: v7x
topology: tpu7x:2x2x1
jax: 0.10.0
libtpu: 0.0.40
codegen_flags: <defaults>
</compile_context>

<pallas_src>
import math
from functools import partial

import jax
import jax.numpy as jnp
from jax.experimental import pallas as pl
from jax.experimental.pallas import tpu as pltpu


def _round_up(x, m):
    return (x + m - 1) // m * m


def _gemma_mlp_kernel(x_ref, wg_ref, wu_ref, wd_ref, o_ref, acc_ref):
    """One (token-tile, intermediate-tile) step of the Gemma MLP.

    Grid = (cdiv(Mp, tm), I // ti): axis 0 tiles tokens ("parallel"), axis 1
    tiles the intermediate dimension ("arbitrary" reduction for the down
    projection, carried in a persistent f32 accumulator in VMEM scratch).
    """
    j = pl.program_id(1)
    nj = pl.num_programs(1)

    @pl.when(j == 0)
    def _init():
        acc_ref[...] = jnp.zeros_like(acc_ref)

    # Cast activations to the weight dtype in-kernel (no wrapper-side XLA cast).
    x = x_ref[...].astype(wg_ref.dtype)  # (tm, H)

    # Two dots sharing the same LHS tile: same MXU FLOPs as a fused [H, 2*ti]
    # weight, but without any per-call weight interleave in HBM.
    gate = jnp.dot(x, wg_ref[...], preferred_element_type=jnp.float32)  # (tm, ti)
    up = jnp.dot(x, wu_ref[...], preferred_element_type=jnp.float32)    # (tm, ti)

    # GELU with tanh approximation (matches PyTorch approximate='tanh').
    c = math.sqrt(2.0 / math.pi)
    g = 0.5 * gate * (1.0 + jnp.tanh(c * (gate + 0.044715 * (gate * gate) * gate)))

    h = (g * up).astype(wd_ref.dtype)  # (tm, ti)

    # Partial down projection; the final accumulation is fused into the
    # epilogue store (no write + re-read of the f32 accumulator on last step).
    total = acc_ref[...] + jnp.dot(h, wd_ref[...], preferred_element_type=jnp.float32)

    @pl.when(j < nj - 1)
    def _carry():
        acc_ref[...] = total

    @pl.when(j == nj - 1)
    def _emit():
        o_ref[...] = total.astype(o_ref.dtype)


def _chip_vmem_params():
    """Chip-aware VMEM budgeting.

    Returns (vmem_limit_bytes, tile_budget_bytes, multi_core).
    v5e/v6e: 128 MiB VMEM, 1 TC/chip.  v7x: 64 MiB VMEM per TC, 2 TCs/chip.
    """
    mib = 1024 * 1024
    try:
        phys = int(pltpu.get_tpu_info().vmem_capacity_bytes)
    except Exception:
        phys = 64 * mib  # conservative fallback (v7x-sized), works everywhere
    vmem_limit = max(32 * mib, phys - 8 * mib)      # leave ~8 MiB headroom
    budget = max(24 * mib, vmem_limit - 16 * mib)   # headroom for misc/internal scratch
    # TODO(synk): query the TensorCore count directly if/when TpuInfo exposes
    # it; <=80 MiB per-core VMEM is used as a proxy for "v7x-like, 2 TCs/chip".
    multi_core = phys <= 80 * mib
    return vmem_limit, budget, multi_core


def _pick_tiles(M, H, I, x_itemsize, w_itemsize, out_itemsize, tm, ti,
                budget, multi_core):
    """Choose (tm, ti, Mp) against the chip's VMEM budget."""
    if ti is None:
        for cand in (512, 256, 128):
            if I % cand == 0:
                ti = cand
                break
        else:
            ti = I  # small / odd intermediate size: single reduction step

    # Token rows are padded only to the sublane packing (8 for f32, 16 for bf16).
    row_align = 16 if (w_itemsize < 4 or x_itemsize < 4) else 8
    Mp = _round_up(M, row_align)

    if tm is None:
        def vmem_need(t):
            return (
                2 * t * H * x_itemsize          # x tiles (double buffered)
                + 2 * H * ti * w_itemsize       # gate weight tiles
                + 2 * H * ti * w_itemsize       # up weight tiles
                + 2 * ti * H * w_itemsize       # down weight tiles
                + 2 * t * H * out_itemsize      # output tiles (x.dtype)
                + t * H * 4                     # f32 accumulator scratch
                # Mosaic compute temporaries: x cast, gate/up/gelu f32, h, total.
                + t * H * (4 + w_itemsize)
                + t * ti * (3 * 4 + w_itemsize)
            )

        # v7x (64 MiB/TC, ~3.2 TB/s HBM) is MXU-bound by tm~512 already; the
        # 128 MiB parts benefit from larger token tiles (fewer weight streams).
        all_cands = (512, 384, 256, 128) if multi_core else (1024, 768, 512, 384, 256, 128)
        cands = [c for c in all_cands if c <= Mp]
        if not cands:
            tm = Mp  # decode / small-M: one tile covers all tokens
        else:
            tm = cands[-1]
            for cand in cands:
                if vmem_need(cand) <= budget:
                    tm = cand
                    break

        # On 2-TC chips make sure the parallel token axis has >= 2 steps so
        # Megacore can shard it; on 1-TC chips keep the single tile (splitting
        # would only re-stream the weights).
        if multi_core and Mp > row_align and pl.cdiv(Mp, tm) < 2:
            tm = _round_up((Mp + 1) // 2, row_align)

    return tm, ti, Mp


@partial(jax.jit, static_argnames=("tm", "ti"))
def gemma_mlp(x, w_gate, w_up, w_down, *, tm=None, ti=None):
    """x: [B, S, H]; w_gate/w_up: [H, I]; w_down: [I, H] -> [B, S, H].

    Weights are stored pre-transposed as [in_features, out_features], i.e. the
    transposes of the corresponding PyTorch nn.Linear weights.
    """
    B, S, H = x.shape
    I = w_gate.shape[1]
    M = B * S

    vmem_limit, budget, multi_core = _chip_vmem_params()
    tm, ti, Mp = _pick_tiles(
        M, H, I,
        jnp.dtype(x.dtype).itemsize,
        jnp.dtype(w_gate.dtype).itemsize,
        jnp.dtype(x.dtype).itemsize,
        tm, ti, budget, multi_core)
    assert I % ti == 0

    # Flatten tokens; pad only to the sublane boundary (NOT to tm) — the last
    # token block may be ragged; Pallas masks its out-of-range stores and the
    # garbage rows never mix across token rows.
    x2d = x.reshape(M, H)
    if Mp != M:
        x2d = jnp.pad(x2d, ((0, Mp - M), (0, 0)))

    grid = (pl.cdiv(Mp, tm), I // ti)

    out = pl.pallas_call(
        _gemma_mlp_kernel,
        out_shape=jax.ShapeDtypeStruct((Mp, H), x.dtype),
        grid_spec=pltpu.PrefetchScalarGridSpec(
            num_scalar_prefetch=0,
            grid=grid,
            in_specs=[
                pl.BlockSpec((tm, H), lambda i, j: (i, 0)),   # x tile
                pl.BlockSpec((H, ti), lambda i, j: (0, j)),   # gate weight tile
                pl.BlockSpec((H, ti), lambda i, j: (0, j)),   # up weight tile
                pl.BlockSpec((ti, H), lambda i, j: (j, 0)),   # down weight tile
            ],
            out_specs=pl.BlockSpec((tm, H), lambda i, j: (i, 0)),
            scratch_shapes=[pltpu.VMEM((tm, H), jnp.float32)],
        ),
        compiler_params=pltpu.CompilerParams(
            dimension_semantics=("parallel", "arbitrary"),
            vmem_limit_bytes=vmem_limit,
        ),
    )(x2d, w_gate, w_up, w_down)

    return out[:M].reshape(B, S, H)


def _reference(x, w_gate, w_up, w_down):
    gate = x @ w_gate
    up = x @ w_up
    c = math.sqrt(2.0 / math.pi)
    g = 0.5 * gate * (1.0 + jnp.tanh(c * (gate + 0.044715 * gate ** 3)))
    return (g * up) @ w_down


if __name__ == "__main__":
    # Small, Gemma-like config: hidden=128, intermediate=256, batch=2, seq=8
    B, S, H, I = 2, 8, 128, 256

    key = jax.random.PRNGKey(0)
    kx, kg, ku, kd = jax.random.split(key, 4)

    x = jax.random.normal(kx, (B, S, H), dtype=jnp.float32)
    # Deterministic "weights" stored as [in, out]; a PyTorch Linear weight is
    # [out, in] — these are the transposes of such weights.
    w_gate = jax.random.normal(kg, (H, I), dtype=jnp.float32) * 0.02
    w_up = jax.random.normal(ku, (H, I), dtype=jnp.float32) * 0.02
    w_down = jax.random.normal(kd, (I, H), dtype=jnp.float32) * 0.02

    out = gemma_mlp(x, w_gate, w_up, w_down)
    out = jax.block_until_ready(out)

    ref = _reference(x, w_gate, w_up, w_down)
    assert out.shape == (B, S, H)
    assert jnp.allclose(out, ref, atol=1e-4, rtol=1e-4), "mismatch vs reference"

    print("KERNEL_OK")
</pallas_src>

<mosaic_0001>
module attributes {stable_mosaic.version = 11 : i64} {
  func.func @_gemma_mlp_kernel(%arg0: i32, %arg1: i32, %arg2: memref<8x128xf32, #tpu.memory_space<vmem>>, %arg3: memref<128x256xf32, #tpu.memory_space<vmem>>, %arg4: memref<128x256xf32, #tpu.memory_space<vmem>>, %arg5: memref<256x128xf32, #tpu.memory_space<vmem>>, %arg6: memref<8x128xf32, #tpu.memory_space<vmem>>, %arg7: memref<8x128xf32, #tpu.memory_space<vmem>>) attributes {dimension_semantics = [#tpu.dimension_semantics<parallel>, #tpu.dimension_semantics<arbitrary>], iteration_bounds = array<i64: 2, 1>, scalar_prefetch = 0 : i64, scratch_operands = 1 : i64, tpu.core_type = #tpu.core_type<tc>, window_params = [{transform_indices = @transform_0, window_bounds = array<i64: 8, 128>}, {transform_indices = @transform_1, window_bounds = array<i64: 128, 256>}, {transform_indices = @transform_2, window_bounds = array<i64: 128, 256>}, {transform_indices = @transform_3, window_bounds = array<i64: 256, 128>}, {transform_indices = @transform_4, window_bounds = array<i64: 8, 128>}]} {
    %c0_i32 = arith.constant 0 : i32
    %0 = arith.cmpi eq, %arg1, %c0_i32 : i32
    %1 = arith.extui %0 : i1 to i32
    %c0_i32_0 = arith.constant 0 : i32
    %2 = arith.cmpi ne, %1, %c0_i32_0 : i32
    scf.if %2 {
      %cst_20 = arith.constant 0.000000e+00 : f32
      %32 = vector.broadcast %cst_20 : f32 to vector<8x128xf32>
      %c0_21 = arith.constant 0 : index
      %c0_22 = arith.constant 0 : index
      %33 = vector.load %arg7[%c0_21, %c0_22] : memref<8x128xf32, #tpu.memory_space<vmem>>, vector<8x128xf32>
      tpu.vector_store %arg7[%c0_21, %c0_22], %32 {strides = array<i32>} : memref<8x128xf32, #tpu.memory_space<vmem>>, vector<8x128xf32>,
    } else {
    }
    %c0 = arith.constant 0 : index
    %c0_1 = arith.constant 0 : index
    %3 = vector.load %arg2[%c0, %c0_1] : memref<8x128xf32, #tpu.memory_space<vmem>>, vector<8x128xf32>
    %c0_2 = arith.constant 0 : index
    %c0_3 = arith.constant 0 : index
    %4 = vector.load %arg3[%c0_2, %c0_3] : memref<128x256xf32, #tpu.memory_space<vmem>>, vector<128x256xf32>
    %cst = arith.constant dense<0.000000e+00> : vector<8x256xf32>
    %5 = tpu.matmul %3, %4, %cst {dimension_numbers = #tpu.dot_dimension_numbers<[1], [0], [0], [1], [0, 0, 1, 1], [], []>} : vector<8x128xf32>, vector<128x256xf32>, vector<8x256xf32> -> vector<8x256xf32>
    %c0_4 = arith.constant 0 : index
    %c0_5 = arith.constant 0 : index
    %6 = vector.load %arg4[%c0_4, %c0_5] : memref<128x256xf32, #tpu.memory_space<vmem>>, vector<128x256xf32>
    %cst_6 = arith.constant dense<0.000000e+00> : vector<8x256xf32>
    %7 = tpu.matmul %3, %6, %cst_6 {dimension_numbers = #tpu.dot_dimension_numbers<[1], [0], [0], [1], [0, 0, 1, 1], [], []>} : vector<8x128xf32>, vector<128x256xf32>, vector<8x256xf32> -> vector<8x256xf32>
    %cst_7 = arith.constant 5.000000e-01 : f32
    %8 = vector.broadcast %cst_7 : f32 to vector<8x256xf32>
    %9 = arith.mulf %8, %5 : vector<8x256xf32>
    %10 = arith.mulf %5, %5 : vector<8x256xf32>
    %cst_8 = arith.constant 4.471500e-02 : f32
    %11 = vector.broadcast %cst_8 : f32 to vector<8x256xf32>
    %12 = arith.mulf %11, %10 : vector<8x256xf32>
    %13 = arith.mulf %12, %5 : vector<8x256xf32>
    %14 = arith.addf %5, %13 : vector<8x256xf32>
    %cst_9 = arith.constant 0.797884583 : f32
    %15 = vector.broadcast %cst_9 : f32 to vector<8x256xf32>
    %16 = arith.mulf %15, %14 : vector<8x256xf32>
    %17 = math.tanh %16 : vector<8x256xf32>
    %cst_10 = arith.constant 1.000000e+00 : f32
    %18 = vector.broadcast %cst_10 : f32 to vector<8x256xf32>
    %19 = arith.addf %18, %17 : vector<8x256xf32>
    %20 = arith.mulf %9, %19 : vector<8x256xf32>
    %21 = arith.mulf %20, %7 : vector<8x256xf32>
    %c0_11 = arith.constant 0 : index
    %c0_12 = arith.constant 0 : index
    %22 = vector.load %arg7[%c0_11, %c0_12] : memref<8x128xf32, #tpu.memory_space<vmem>>, vector<8x128xf32>
    %c0_13 = arith.constant 0 : index
    %c0_14 = arith.constant 0 : index
    %23 = vector.load %arg5[%c0_13, %c0_14] : memref<256x128xf32, #tpu.memory_space<vmem>>, vector<256x128xf32>
    %cst_15 = arith.constant dense<0.000000e+00> : vector<8x128xf32>
    %24 = tpu.matmul %21, %23, %cst_15 {dimension_numbers = #tpu.dot_dimension_numbers<[1], [0], [0], [1], [0, 0, 1, 1], [], []>} : vector<8x256xf32>, vector<256x128xf32>, vector<8x128xf32> -> vector<8x128xf32>
    %25 = arith.addf %22, %24 : vector<8x128xf32>
    %c0_i32_16 = arith.constant 0 : i32
    %26 = arith.cmpi slt, %arg1, %c0_i32_16 : i32
    %27 = arith.extui %26 : i1 to i32
    %c0_i32_17 = arith.constant 0 : i32
    %28 = arith.cmpi ne, %27, %c0_i32_17 : i32
    scf.if %28 {
      %c0_20 = arith.constant 0 : index
      %c0_21 = arith.constant 0 : index
      %32 = vector.load %arg7[%c0_20, %c0_21] : memref<8x128xf32, #tpu.memory_space<vmem>>, vector<8x128xf32>
      tpu.vector_store %arg7[%c0_20, %c0_21], %25 {strides = array<i32>} : memref<8x128xf32, #tpu.memory_space<vmem>>, vector<8x128xf32>,
    } else {
    }
    %c0_i32_18 = arith.constant 0 : i32
    %29 = arith.cmpi eq, %arg1, %c0_i32_18 : i32
    %30 = arith.extui %29 : i1 to i32
    %c0_i32_19 = arith.constant 0 : i32
    %31 = arith.cmpi ne, %30, %c0_i32_19 : i32
    scf.if %31 {
      %c0_20 = arith.constant 0 : index
      %c0_21 = arith.constant 0 : index
      %32 = vector.load %arg6[%c0_20, %c0_21] : memref<8x128xf32, #tpu.memory_space<vmem>>, vector<8x128xf32>
      tpu.vector_store %arg6[%c0_20, %c0_21], %25 {strides = array<i32>} : memref<8x128xf32, #tpu.memory_space<vmem>>, vector<8x128xf32>,
    } else {
    }
    return
  }
  func.func @transform_0(%arg0: i32, %arg1: i32) -> (i32, i32) {
    %c0_i32 = arith.constant 0 : i32
    %c0_i32_0 = arith.constant 0 : i32
    return %arg0, %c0_i32 : i32, i32
  }
  func.func @transform_1(%arg0: i32, %arg1: i32) -> (i32, i32) {
    %c0_i32 = arith.constant 0 : i32
    %c0_i32_0 = arith.constant 0 : i32
    return %c0_i32, %arg1 : i32, i32
  }
  func.func @transform_2(%arg0: i32, %arg1: i32) -> (i32, i32) {
    %c0_i32 = arith.constant 0 : i32
    %c0_i32_0 = arith.constant 0 : i32
    return %c0_i32, %arg1 : i32, i32
  }
  func.func @transform_3(%arg0: i32, %arg1: i32) -> (i32, i32) {
    %c0_i32 = arith.constant 0 : i32
    %c0_i32_0 = arith.constant 0 : i32
    return %arg1, %c0_i32 : i32, i32
  }
  func.func @transform_4(%arg0: i32, %arg1: i32) -> (i32, i32) {
    %c0_i32 = arith.constant 0 : i32
    %c0_i32_0 = arith.constant 0 : i32
    return %arg0, %c0_i32 : i32, i32
  }
}

</mosaic_0001>

<llo_original>
// kernel: gemma_mlp.1
$region0: #{gemma_mlp.1}
  #allocation0 [shape = 'u32[]', space=smem, size = 0x4, offset = 0x4, fixed_abs, tag = 'smem constant byte address 0x4 - core index']
  #allocation1 [shape = 'u32[144,128]{1,0:T(1,128)}', space=vmem, size = 0x12000, scoped, tag = 'internal scratch']
  #allocation2 [shape = 'f32[8,128]{1,0:T(8,128)}', space=vmem, size = 0x1000, scoped, tag = 'scratch operand']
  %s0 = inlined_call_operand.hbm [shape: f32[16,128], index: 0, kind: input, shape index: {}]
  %s1 = inlined_call_operand.hbm [shape: f32[128,256], index: 1, kind: input, shape index: {}]
  %s2 = inlined_call_operand.hbm [shape: f32[128,256], index: 2, kind: input, shape index: {}]
  %s3 = inlined_call_operand.hbm [shape: f32[256,128], index: 3, kind: input, shape index: {}]
  %s4 = inlined_call_operand.hbm [shape: f32[16,128], index: 4, kind: output, shape index: {}]
  %s5 = sld [smem:[#allocation0]]
  $region77: #{gemma_mlp.1} parent=0
    _
  %s7 = ssub.s32 1, %s5
  %s8 = scalar_select 0, %s7, %s5
  $region1: #{gemma_mlp.1} parent=0
    #allocation3 [shape = 'u8[8192]{0}', space=vmem, size = 0x2000, scoped, tag = 'input window, operand 0']
    #allocation4 [shape = 's32[2]{0}', space=sflag, size = 0x8, scoped, tag = 'scoped memory for gemma_mlp.1']
    #allocation5 [shape = 's32[2]{0}', space=sflag, size = 0x8, scoped, tag = 'scoped memory for gemma_mlp.1']
    #allocation6 [shape = 'u8[131072]{0}', space=vmem, size = 0x20000, scoped, tag = 'input window, operand 1, single buffered']
    #allocation7 [shape = 's32[1]{0}', space=sflag, size = 0x4, scoped, tag = 'scoped memory for gemma_mlp.1']
    #allocation8 [shape = 'u8[131072]{0}', space=vmem, size = 0x20000, scoped, tag = 'input window, operand 2, single buffered']
    #allocation9 [shape = 'u8[131072]{0}', space=vmem, size = 0x20000, scoped, tag = 'input window, operand 3, single buffered']
    #allocation10 [shape = 's32[1]{0}', space=sflag, size = 0x4, scoped, tag = 'scoped memory for gemma_mlp.1']
    #allocation11 [shape = 'u8[8192]{0}', space=vmem, size = 0x2000, scoped, tag = 'output window, operand 0']
    %9 = vsyncpa [#allocation4], 0
    %s10 = scalar_lea.sflag [#allocation4], 1
    %11 = vsyncpa %s10, 0
    %12 = vsyncpa [#allocation7], 0
    %13 = vsyncpa [#allocation10], 0
    %14 = vsyncpa [#allocation5], 0
    %s15 = scalar_lea.sflag [#allocation5], 1
    %16 = vsyncpa %s15, 0
    loop: start=0, step=1, limit=4
    $region2: #{gemma_mlp.1} parent=1 // loop_pre_header
      _
    $region3: #{gemma_mlp.1} parent=1 // loop_header
      %s18 = sphi 0, %s22
      %p19 = scmp.ge.s32.totalorder %s18, 4
      %s25 = sphi 0, %s37
      %s26 = sphi 0, %s33
      %s27 = sphi 0, %s25
      %s28 = sphi 0, %s26
      %s29 = sphi 0, %s27
      %s30 = sphi 0, %s28
      %s40 = sphi 0, %s42
      %s43 = sphi 0, %s40
      %s44 = sphi 0, %s43
      %s60 = sphi 0, %s44
      %s66 = sphi 0, %s68
      %s69 = sphi 0, %s66
      %s70 = sphi 0, %s69
      %s86 = sphi 0, %s70
      %s92 = sphi 0, %s94
      %s95 = sphi 0, %s92
      %s96 = sphi 0, %s95
      %s112 = sphi 0, %s96
      %s118 = sphi 0, %s120
      %s121 = sphi 0, %s118
      %s122 = sphi 0, %s121
      %s138 = sphi 0, %s122
      %s144 = sphi 0, %s146
      %s147 = sphi 0, %s144
      %s148 = sphi 0, %s147
      %s164 = sphi 0, %s148
    $region4: #{gemma_mlp.1} parent=1 // loop_header_branch
      %21 = sbr.rel (%p19) target = $region8
    $region5: #{gemma_mlp.1} parent=1 // loop_body
      %s23 = ssub.s32 %s18, 1
      %s24 = ssub.s32 %s18, 2
      %s31 = sadd.s32 1, %s26
      %p32 = scmp.ge.s32.totalorder %s31, 1
      %s33 = scalar_select %p32, 0, %s31
      %s34 = sadd.s32 1, %s25
      %s35 = scalar_select %p32, %s34, %s25
      %p36 = scmp.ge.s32.totalorder %s35, 2
      %s37 = scalar_select %p36, 0, %s35
      %s38 = ssub.s32 %s25, %s37
      %p39 = scmp.eq.s32.totalorder %s38, 0
      %s41 = sadd.s32 %s40, 1
      %s42 = scalar_select %p39, %s40, %s41
      %p45 = pneg %p39
      %p46 = scmp.eq.s32.totalorder %s18, 1
      %p47 = por %p45, %p46
      %p48 = scmp.ne.s32.totalorder %s40, %s43
      %p49 = scmp.eq.s32.totalorder %s18, 0
      %p50 = por %p48, %p49
      %p51 = scmp.ne.s32.totalorder %s40, %s43
      %p52 = scmp.eq.s32.totalorder %s23, 1
      %p53 = por %p51, %p52
      %p54 = scmp.ne.s32.totalorder %s43, %s44
      %p55 = scmp.eq.s32.totalorder %s23, 0
      %p56 = por %p54, %p55
      %p57 = scmp.ne.s32.totalorder %s43, %s44
      %p58 = scmp.eq.s32.totalorder %s24, 1
      %p59 = por %p57, %p58
      %p61 = scmp.ne.s32.totalorder %s44, %s60
      %p62 = scmp.eq.s32.totalorder %s24, 0
      %p63 = por %p61, %p62
      %s64 = ssub.s32 %s26, %s33
      %p65 = scmp.eq.s32.totalorder %s64, 0
      %s67 = sadd.s32 %s66, 1
      %s68 = scalar_select %p65, %s66, %s67
      %p71 = pneg %p65
      %p72 = scmp.eq.s32.totalorder %s18, 1
      %p73 = por %p71, %p72
      %p74 = scmp.ne.s32.totalorder %s66, %s69
      %p75 = scmp.eq.s32.totalorder %s18, 0
      %p76 = por %p74, %p75
      %p77 = scmp.ne.s32.totalorder %s66, %s69
      %p78 = scmp.eq.s32.totalorder %s23, 1
      %p79 = por %p77, %p78
      %p80 = scmp.ne.s32.totalorder %s69, %s70
      %p81 = scmp.eq.s32.totalorder %s23, 0
      %p82 = por %p80, %p81
      %p83 = scmp.ne.s32.totalorder %s69, %s70
      %p84 = scmp.eq.s32.totalorder %s24, 1
      %p85 = por %p83, %p84
      %p87 = scmp.ne.s32.totalorder %s70, %s86
      %p88 = scmp.eq.s32.totalorder %s24, 0
      %p89 = por %p87, %p88
      %s90 = ssub.s32 %s26, %s33
      %p91 = scmp.eq.s32.totalorder %s90, 0
      %s93 = sadd.s32 %s92, 1
      %s94 = scalar_select %p91, %s92, %s93
      %p97 = pneg %p91
      %p98 = scmp.eq.s32.totalorder %s18, 1
      %p99 = por %p97, %p98
      %p100 = scmp.ne.s32.totalorder %s92, %s95
      %p101 = scmp.eq.s32.totalorder %s18, 0
      %p102 = por %p100, %p101
      %p103 = scmp.ne.s32.totalorder %s92, %s95
      %p104 = scmp.eq.s32.totalorder %s23, 1
      %p105 = por %p103, %p104
      %p106 = scmp.ne.s32.totalorder %s95, %s96
      %p107 = scmp.eq.s32.totalorder %s23, 0
      %p108 = por %p106, %p107
      %p109 = scmp.ne.s32.totalorder %s95, %s96
      %p110 = scmp.eq.s32.totalorder %s24, 1
      %p111 = por %p109, %p110
      %p113 = scmp.ne.s32.totalorder %s96, %s112
      %p114 = scmp.eq.s32.totalorder %s24, 0
      %p115 = por %p113, %p114
      %s116 = ssub.s32 %s26, %s33
      %p117 = scmp.eq.s32.totalorder %s116, 0
      %s119 = sadd.s32 %s118, 1
      %s120 = scalar_select %p117, %s118, %s119
      %p123 = pneg %p117
      %p124 = scmp.eq.s32.totalorder %s18, 1
      %p125 = por %p123, %p124
      %p126 = scmp.ne.s32.totalorder %s118, %s121
      %p127 = scmp.eq.s32.totalorder %s18, 0
      %p128 = por %p126, %p127
      %p129 = scmp.ne.s32.totalorder %s118, %s121
      %p130 = scmp.eq.s32.totalorder %s23, 1
      %p131 = por %p129, %p130
      %p132 = scmp.ne.s32.totalorder %s121, %s122
      %p133 = scmp.eq.s32.totalorder %s23, 0
      %p134 = por %p132, %p133
      %p135 = scmp.ne.s32.totalorder %s121, %s122
      %p136 = scmp.eq.s32.totalorder %s24, 1
      %p137 = por %p135, %p136
      %p139 = scmp.ne.s32.totalorder %s122, %s138
      %p140 = scmp.eq.s32.totalorder %s24, 0
      %p141 = por %p139, %p140
      %s142 = ssub.s32 %s25, %s37
      %p143 = scmp.eq.s32.totalorder %s142, 0
      %s145 = sadd.s32 %s144, 1
      %s146 = scalar_select %p143, %s144, %s145
      %p149 = pneg %p143
      %p150 = scmp.eq.s32.totalorder %s18, 1
      %p151 = por %p149, %p150
      %p152 = scmp.ne.s32.totalorder %s144, %s147
      %p153 = scmp.eq.s32.totalorder %s18, 0
      %p154 = por %p152, %p153
      %p155 = scmp.ne.s32.totalorder %s144, %s147
      %p156 = scmp.eq.s32.totalorder %s23, 1
      %p157 = por %p155, %p156
      %p158 = scmp.ne.s32.totalorder %s147, %s148
      %p159 = scmp.eq.s32.totalorder %s23, 0
      %p160 = por %p158, %p159
      %p161 = scmp.ne.s32.totalorder %s147, %s148
      %p162 = scmp.eq.s32.totalorder %s24, 1
      %p163 = por %p161, %p162
      %p165 = scmp.ne.s32.totalorder %s148, %s164
      %p166 = scmp.eq.s32.totalorder %s24, 0
      %p167 = por %p165, %p166
      %p168 = scmp.le.s32.totalorder 1, %s18
      %p169 = scmp.lt.s32.totalorder %s18, 3
      %p170 = pnand %p168, %p169
      %p171 = pneg %p170
      // Predicated region
      $region9: #{gemma_mlp.1} parent=5 // pred_check
        _
      $region10: #{gemma_mlp.1} parent=5 // pred_check_branch
        %173 = sbr.rel (%p170) target = $region12
      $region11: #{gemma_mlp.1} parent=5 // pred_region
        %s174 = ssub.s32 %s18, 1
        // Predicated region
        $region13: #{gemma_mlp.1} parent=11 // pred_check
          %p175 = pneg %p82
        $region14: #{gemma_mlp.1} parent=11 // pred_check_branch
          %177 = sbr.rel (%p175) target = $region16
        $region15: #{gemma_mlp.1} parent=11 // pred_region
          %s178 = smul.u32 2, %s28
          %s180 = ssub.s32 4096, 4096
          %181 = vsyncadd [#allocation7], %s180
          %s182 = smul.addr %s178, 128
          %s183 = scalar_lea.hbm %s1, %s182
          %s184 = sshll.u32 [#allocation6], 4
          %s185 = int_to_ptr.vmem [resolvable:$true] %s184
          %190 = dma.hbm_to_vmem [thread:$0]  %s183, 4096, %s185, [#allocation7], 256, 256, 16
        $region16: #{gemma_mlp.1} parent=11 // pred_fallthru
          _
        // Predicated region
        $region17: #{gemma_mlp.1} parent=11 // pred_check
          %p191 = pneg %p108
        $region18: #{gemma_mlp.1} parent=11 // pred_check_branch
          %193 = sbr.rel (%p191) target = $region20
        $region19: #{gemma_mlp.1} parent=11 // pred_region
          %s194 = smul.u32 2, %s28
          %s196 = ssub.s32 4096, 4096
          %197 = vsyncadd [#allocation7], %s196
          %s198 = smul.addr %s194, 128
          %s199 = scalar_lea.hbm %s2, %s198
          %s200 = sshll.u32 [#allocation8], 4
          %s201 = int_to_ptr.vmem [resolvable:$true] %s200
          %206 = dma.hbm_to_vmem [thread:$0]  %s199, 4096, %s201, [#allocation7], 256, 256, 16
        $region20: #{gemma_mlp.1} parent=11 // pred_fallthru
          _
        // Predicated region
        $region21: #{gemma_mlp.1} parent=11 // pred_check
          %p207 = pneg %p134
        $region22: #{gemma_mlp.1} parent=11 // pred_check_branch
          %209 = sbr.rel (%p207) target = $region24
        $region23: #{gemma_mlp.1} parent=11 // pred_region
          %s210 = smul.u32 32, %s28
          %s212 = ssub.s32 4096, 4096
          %213 = vsyncadd [#allocation10], %s212
          %s214 = smul.addr %s210, 128
          %s215 = scalar_lea.hbm %s3, %s214
          %s216 = sshll.u32 [#allocation9], 4
          %s217 = int_to_ptr.vmem [resolvable:$true] %s216
          %222 = dma.hbm_to_vmem [thread:$0]  %s215, 4096, %s217, [#allocation10], 128, 128, 8
        $region24: #{gemma_mlp.1} parent=11 // pred_fallthru
          _
      $region12: #{gemma_mlp.1} parent=5 // pred_fallthru
        _
      %p223 = scmp.lt.s32.totalorder %s18, 2
      // Predicated region
      $region25: #{gemma_mlp.1} parent=5 // pred_check
        %p224 = pneg %p223
      $region26: #{gemma_mlp.1} parent=5 // pred_check_branch
        %226 = sbr.rel (%p224) target = $region28
      $region27: #{gemma_mlp.1} parent=5 // pred_region
        // Predicated region
        $region29: #{gemma_mlp.1} parent=27 // pred_check
          %p227 = pneg %p50
        $region30: #{gemma_mlp.1} parent=27 // pred_check_branch
          %229 = sbr.rel (%p227) target = $region32
        $region31: #{gemma_mlp.1} parent=27 // pred_region
          %s230 = sand.u32 %s40, 1
          %s231 = scalar_lea.sflag [#allocation4], %s230
          %s232 = sand.u32 %s40, 1
          %s233 = smul.addr %s232, 8
          %s234 = scalar_lea.vmem [#allocation3], %s233
          %s236 = ssub.s32 128, 128
          %237 = vsyncadd %s231, %s236
          %s238 = smul.addr %s25, 128
          %s239 = scalar_lea.hbm %s0, %s238
          %s241 = sshll.u32 %s234, 4
          %s242 = int_to_ptr.vmem [resolvable:$true] %s241
          %244 = dma.hbm_to_vmem [thread:$0]  %s239, 128, %s242, %s231
        $region32: #{gemma_mlp.1} parent=27 // pred_fallthru
          _
      $region28: #{gemma_mlp.1} parent=5 // pred_fallthru
        _
      %p245 = scmp.le.s32.totalorder 1, %s18
      %p246 = scmp.lt.s32.totalorder %s18, 3
      %p247 = pnand %p245, %p246
      %p248 = pneg %p247
      // Predicated region
      $region33: #{gemma_mlp.1} parent=5 // pred_check
        _
      $region34: #{gemma_mlp.1} parent=5 // pred_check_branch
        %250 = sbr.rel (%p247) target = $region36
      $region35: #{gemma_mlp.1} parent=5 // pred_region
        %s251 = ssub.s32 %s18, 1
        %s252 = sand.u32 %s43, 1
        %s253 = scalar_lea.sflag [#allocation4], %s252
        %s254 = sand.u32 %s43, 1
        %s255 = smul.addr %s254, 8
        %s256 = scalar_lea.vmem [#allocation3], %s255
        // Predicated region
        $region37: #{gemma_mlp.1} parent=35 // pred_check
          %p257 = pneg %p56
        $region38: #{gemma_mlp.1} parent=35 // pred_check_branch
          %259 = sbr.rel (%p257) target = $region40
        $region39: #{gemma_mlp.1} parent=35 // pred_region
          %260 = dma.done %s253, 128
        $region40: #{gemma_mlp.1} parent=35 // pred_fallthru
          _
        // Predicated region
        $region41: #{gemma_mlp.1} parent=35 // pred_check
          %p261 = pneg %p82
        $region42: #{gemma_mlp.1} parent=35 // pred_check_branch
          %263 = sbr.rel (%p261) target = $region44
        $region43: #{gemma_mlp.1} parent=35 // pred_region
          %264 = dma.done [#allocation7], 4096
        $region44: #{gemma_mlp.1} parent=35 // pred_fallthru
          _
        // Predicated region
        $region45: #{gemma_mlp.1} parent=35 // pred_check
          %p265 = pneg %p108
        $region46: #{gemma_mlp.1} parent=35 // pred_check_branch
          %267 = sbr.rel (%p265) target = $region48
        $region47: #{gemma_mlp.1} parent=35 // pred_region
          %268 = dma.done [#allocation7], 4096
        $region48: #{gemma_mlp.1} parent=35 // pred_fallthru
          _
        // Predicated region
        $region49: #{gemma_mlp.1} parent=35 // pred_check
          %p269 = pneg %p134
        $region50: #{gemma_mlp.1} parent=35 // pred_check_branch
          %271 = sbr.rel (%p269) target = $region52
        $region51: #{gemma_mlp.1} parent=35 // pred_region
          %272 = dma.done [#allocation10], 4096
        $region52: #{gemma_mlp.1} parent=35 // pred_fallthru
          _
        %s273 = sand.u32 %s43, 1
        %s274 = scalar_lea.sflag [#allocation4], %s273
        %s275 = sand.u32 %s43, 1
        %s276 = smul.addr %s275, 8
        %s277 = scalar_lea.vmem [#allocation3], %s276
        %p278 = pneg %p56
        %p279 = pneg %p53
        %p280 = pneg %p82
        %p281 = pneg %p79
        %p282 = pneg %p108
        %p283 = pneg %p105
        %p284 = pneg %p134
        %p285 = pneg %p131
        %p286 = pneg %p160
        %p287 = pneg %p157
        %s288 = sand.u32 %s147, 1
        %s289 = scalar_lea.sflag [#allocation5], %s288
        %s290 = sand.u32 %s147, 1
        %s291 = smul.addr %s290, 8
        %s292 = scalar_lea.vmem [#allocation11], %s291
        %s293 = smul.u32 2, %s28
        %s294 = smul.u32 2, %s28
        %s295 = smul.u32 32, %s28
        %p296 = scmp.eq.s32.totalorder %s28, 0
        // Predicated region
        $region53: #{gemma_mlp.1} parent=35 // pred_check
          %p297 = pneg %p296
        $region54: #{gemma_mlp.1} parent=35 // pred_check_branch
          %299 = sbr.rel (%p297) target = $region56
        $region55: #{gemma_mlp.1} parent=35 // pred_region
          %300 = vst [vmem:[#allocation2] sm:$0xff] 0.0
        $region56: #{gemma_mlp.1} parent=35 // pred_fallthru
          _
        %v301 = vld [vmem:[%s256] sm:$0xff]
        %v302 = vld [vmem:[#allocation6] sm:$0xff]
        %v303 = vld [vmem:[#allocation6 + $0x8] sm:$0xff]
        %v304 = vld [vmem:[#allocation6 + $0x10] sm:$0xff]
        %v305 = vld [vmem:[#allocation6 + $0x18] sm:$0xff]
        %v306 = vld [vmem:[#allocation6 + $0x20] sm:$0xff]
        %v307 = vld [vmem:[#allocation6 + $0x28] sm:$0xff]
        %v308 = vld [vmem:[#allocation6 + $0x30] sm:$0xff]
        %v309 = vld [vmem:[#allocation6 + $0x38] sm:$0xff]
        %v310 = vld [vmem:[#allocation6 + $0x40] sm:$0xff]
        %v311 = vld [vmem:[#allocation6 + $0x48] sm:$0xff]
        %v312 = vld [vmem:[#allocation6 + $0x50] sm:$0xff]
        %v313 = vld [vmem:[#allocation6 + $0x58] sm:$0xff]
        %v314 = vld [vmem:[#allocation6 + $0x60] sm:$0xff]
        %v315 = vld [vmem:[#allocation6 + $0x68] sm:$0xff]
        %v316 = vld [vmem:[#allocation6 + $0x70] sm:$0xff]
        %v317 = vld [vmem:[#allocation6 + $0x78] sm:$0xff]
        %v318 = vld [vmem:[#allocation6 + $0x80] sm:$0xff]
        %v319 = vld [vmem:[#allocation6 + $0x88] sm:$0xff]
        %v320 = vld [vmem:[#allocation6 + $0x90] sm:$0xff]
        %v321 = vld [vmem:[#allocation6 + $0x98] sm:$0xff]
        %v322 = vld [vmem:[#allocation6 + $0xa0] sm:$0xff]
        %v323 = vld [vmem:[#allocation6 + $0xa8] sm:$0xff]
        %v324 = vld [vmem:[#allocation6 + $0xb0] sm:$0xff]
        %v325 = vld [vmem:[#allocation6 + $0xb8] sm:$0xff]
        %v326 = vld [vmem:[#allocation6 + $0xc0] sm:$0xff]
        %v327 = vld [vmem:[#allocation6 + $0xc8] sm:$0xff]
        %v328 = vld [vmem:[#allocation6 + $0xd0] sm:$0xff]
        %v329 = vld [vmem:[#allocation6 + $0xd8] sm:$0xff]
        %v330 = vld [vmem:[#allocation6 + $0xe0] sm:$0xff]
        %v331 = vld [vmem:[#allocation6 + $0xe8] sm:$0xff]
        %v332 = vld [vmem:[#allocation6 + $0xf0] sm:$0xff]
        %v333 = vld [vmem:[#allocation6 + $0xf8] sm:$0xff]
        %334 = vmatprep.subr.mxu0 %v303
        %335 = vmatpush1.msra.mxu0 %v302
        %336 = vmatprep.subr.mxu0 %v305
        %337 = vmatpush1.msra.mxu0 %v304
        %338 = vmatprep.subr.mxu0 %v307
        %339 = vmatpush1.msra.mxu0 %v306
        %340 = vmatprep.subr.mxu0 %v309
        %341 = vmatpush1.msra.mxu0 %v308
        %342 = vmatprep.subr.mxu0 %v311
        %343 = vmatpush1.msra.mxu0 %v310
        %344 = vmatprep.subr.mxu0 %v313
        %345 = vmatpush1.msra.mxu0 %v312
        %346 = vmatprep.subr.mxu0 %v315
        %347 = vmatpush1.msra.mxu0 %v314
        %348 = vmatprep.subr.mxu0 %v317
        %349 = vmatpush1.msra.mxu0 %v316
        %350 = vmatprep.subr.mxu0 %v319
        %351 = vmatpush1.msra.mxu0 %v318
        %352 = vmatprep.subr.mxu0 %v321
        %353 = vmatpush1.msra.mxu0 %v320
        %354 = vmatprep.subr.mxu0 %v323
        %355 = vmatpush1.msra.mxu0 %v322
        %356 = vmatprep.subr.mxu0 %v325
        %357 = vmatpush1.msra.mxu0 %v324
        %358 = vmatprep.subr.mxu0 %v327
        %359 = vmatpush1.msra.mxu0 %v326
        %360 = vmatprep.subr.mxu0 %v329
        %361 = vmatpush1.msra.mxu0 %v328
        %362 = vmatprep.subr.mxu0 %v331
        %363 = vmatpush1.msra.mxu0 %v330
        %364 = vmatprep.subr.mxu0 %v333
        %365 = vmatpush1.msra.mxu0 %v332
        %366 = vmatprep.subr.mxu0 0.0
        %367 = vmatpush1.msra.mxu0 0.0
        %368 = vmatprep.subr.mxu0 0.0
        %369 = vmatpush1.msra.mxu0 0.0
        %370 = vmatprep.subr.mxu0 0.0
        %371 = vmatpush1.msra.mxu0 0.0
        %372 = vmatprep.subr.mxu0 0.0
        %373 = vmatpush1.msra.mxu0 0.0
        %374 = vmatprep.subr.mxu0 0.0
        %375 = vmatpush1.msra.mxu0 0.0
        %376 = vmatprep.subr.mxu0 0.0
        %377 = vmatpush1.msra.mxu0 0.0
        %378 = vmatprep.subr.mxu0 0.0
        %379 = vmatpush1.msra.mxu0 0.0
        %380 = vmatprep.subr.mxu0 0.0
        %381 = vmatpush1.msra.mxu0 0.0
        %382 = vmatprep.subr.mxu0 0.0
        %383 = vmatpush1.msra.mxu0 0.0
        %384 = vmatprep.subr.mxu0 0.0
        %385 = vmatpush1.msra.mxu0 0.0
        %386 = vmatprep.subr.mxu0 0.0
        %387 = vmatpush1.msra.mxu0 0.0
        %388 = vmatprep.subr.mxu0 0.0
        %389 = vmatpush1.msra.mxu0 0.0
        %390 = vmatprep.subr.mxu0 0.0
        %391 = vmatpush1.msra.mxu0 0.0
        %392 = vmatprep.subr.mxu0 0.0
        %393 = vmatpush1.msra.mxu0 0.0
        %394 = vmatprep.subr.mxu0 0.0
        %395 = vmatpush1.msra.mxu0 0.0
        %396 = vmatprep.subr.mxu0 0.0
        %397 = vmatpush1.msra.mxu0 0.0
        %398 = vmatprep.mubr.f32.mxu0 0.0
        %399 = vmatmul.mubr.f32.gmra.mrb[0].mxu0 %v301
        %v400 = vpop.f32.mrb[0].mxu0
        %v401 = vadd.f32 0.0, %v400
        %v402 = vpop.f32.mrb[0].mxu0
        %v403 = vadd.f32 0.0, %v402
        %404 = vdwg.mxu0
        %v405 = vld [vmem:[#allocation8] sm:$0xff]
        %v406 = vld [vmem:[#allocation8 + $0x8] sm:$0xff]
        %v407 = vld [vmem:[#allocation8 + $0x10] sm:$0xff]
        %v408 = vld [vmem:[#allocation8 + $0x18] sm:$0xff]
        %v409 = vld [vmem:[#allocation8 + $0x20] sm:$0xff]
        %v410 = vld [vmem:[#allocation8 + $0x28] sm:$0xff]
        %v411 = vld [vmem:[#allocation8 + $0x30] sm:$0xff]
        %v412 = vld [vmem:[#allocation8 + $0x38] sm:$0xff]
        %v413 = vld [vmem:[#allocation8 + $0x40] sm:$0xff]
        %v414 = vld [vmem:[#allocation8 + $0x48] sm:$0xff]
        %v415 = vld [vmem:[#allocation8 + $0x50] sm:$0xff]
        %v416 = vld [vmem:[#allocation8 + $0x58] sm:$0xff]
        %v417 = vld [vmem:[#allocation8 + $0x60] sm:$0xff]
        %v418 = vld [vmem:[#allocation8 + $0x68] sm:$0xff]
        %v419 = vld [vmem:[#allocation8 + $0x70] sm:$0xff]
        %v420 = vld [vmem:[#allocation8 + $0x78] sm:$0xff]
        %v421 = vld [vmem:[#allocation8 + $0x80] sm:$0xff]
        %v422 = vld [vmem:[#allocation8 + $0x88] sm:$0xff]
        %v423 = vld [vmem:[#allocation8 + $0x90] sm:$0xff]
        %v424 = vld [vmem:[#allocation8 + $0x98] sm:$0xff]
        %v425 = vld [vmem:[#allocation8 + $0xa0] sm:$0xff]
        %v426 = vld [vmem:[#allocation8 + $0xa8] sm:$0xff]
        %v427 = vld [vmem:[#allocation8 + $0xb0] sm:$0xff]
        %v428 = vld [vmem:[#allocation8 + $0xb8] sm:$0xff]
        %v429 = vld [vmem:[#allocation8 + $0xc0] sm:$0xff]
        %v430 = vld [vmem:[#allocation8 + $0xc8] sm:$0xff]
        %v431 = vld [vmem:[#allocation8 + $0xd0] sm:$0xff]
        %v432 = vld [vmem:[#allocation8 + $0xd8] sm:$0xff]
        %v433 = vld [vmem:[#allocation8 + $0xe0] sm:$0xff]
        %v434 = vld [vmem:[#allocation8 + $0xe8] sm:$0xff]
        %v435 = vld [vmem:[#allocation8 + $0xf0] sm:$0xff]
        %v436 = vld [vmem:[#allocation8 + $0xf8] sm:$0xff]
        %437 = vmatprep.subr.mxu0 %v406
        %438 = vmatpush1.msra.mxu0 %v405
        %439 = vmatprep.subr.mxu0 %v408
        %440 = vmatpush1.msra.mxu0 %v407
        %441 = vmatprep.subr.mxu0 %v410
        %442 = vmatpush1.msra.mxu0 %v409
        %443 = vmatprep.subr.mxu0 %v412
        %444 = vmatpush1.msra.mxu0 %v411
        %445 = vmatprep.subr.mxu0 %v414
        %446 = vmatpush1.msra.mxu0 %v413
        %447 = vmatprep.subr.mxu0 %v416
        %448 = vmatpush1.msra.mxu0 %v415
        %449 = vmatprep.subr.mxu0 %v418
        %450 = vmatpush1.msra.mxu0 %v417
        %451 = vmatprep.subr.mxu0 %v420
        %452 = vmatpush1.msra.mxu0 %v419
        %453 = vmatprep.subr.mxu0 %v422
        %454 = vmatpush1.msra.mxu0 %v421
        %455 = vmatprep.subr.mxu0 %v424
        %456 = vmatpush1.msra.mxu0 %v423
        %457 = vmatprep.subr.mxu0 %v426
        %458 = vmatpush1.msra.mxu0 %v425
        %459 = vmatprep.subr.mxu0 %v428
        %460 = vmatpush1.msra.mxu0 %v427
        %461 = vmatprep.subr.mxu0 %v430
        %462 = vmatpush1.msra.mxu0 %v429
        %463 = vmatprep.subr.mxu0 %v432
        %464 = vmatpush1.msra.mxu0 %v431
        %465 = vmatprep.subr.mxu0 %v434
        %466 = vmatpush1.msra.mxu0 %v433
        %467 = vmatprep.subr.mxu0 %v436
        %468 = vmatpush1.msra.mxu0 %v435
        %469 = vmatprep.subr.mxu0 0.0
        %470 = vmatpush1.msra.mxu0 0.0
        %471 = vmatprep.subr.mxu0 0.0
        %472 = vmatpush1.msra.mxu0 0.0
        %473 = vmatprep.subr.mxu0 0.0
        %474 = vmatpush1.msra.mxu0 0.0
        %475 = vmatprep.subr.mxu0 0.0
        %476 = vmatpush1.msra.mxu0 0.0
        %477 = vmatprep.subr.mxu0 0.0
        %478 = vmatpush1.msra.mxu0 0.0
        %479 = vmatprep.subr.mxu0 0.0
        %480 = vmatpush1.msra.mxu0 0.0
        %481 = vmatprep.subr.mxu0 0.0
        %482 = vmatpush1.msra.mxu0 0.0
        %483 = vmatprep.subr.mxu0 0.0
        %484 = vmatpush1.msra.mxu0 0.0
        %485 = vmatprep.subr.mxu0 0.0
        %486 = vmatpush1.msra.mxu0 0.0
        %487 = vmatprep.subr.mxu0 0.0
        %488 = vmatpush1.msra.mxu0 0.0
        %489 = vmatprep.subr.mxu0 0.0
        %490 = vmatpush1.msra.mxu0 0.0
        %491 = vmatprep.subr.mxu0 0.0
        %492 = vmatpush1.msra.mxu0 0.0
        %493 = vmatprep.subr.mxu0 0.0
        %494 = vmatpush1.msra.mxu0 0.0
        %495 = vmatprep.subr.mxu0 0.0
        %496 = vmatpush1.msra.mxu0 0.0
        %497 = vmatprep.subr.mxu0 0.0
        %498 = vmatpush1.msra.mxu0 0.0
        %499 = vmatprep.subr.mxu0 0.0
        %500 = vmatpush1.msra.mxu0 0.0
        %501 = vmatprep.mubr.f32.mxu0 0.0
        %502 = vmatmul.mubr.f32.gmra.mrb[0].mxu0 %v301
        %v503 = vpop.f32.mrb[0].mxu0
        %v504 = vadd.f32 0.0, %v503
        %v505 = vpop.f32.mrb[0].mxu0
        %v506 = vadd.f32 0.0, %v505
        %507 = vdwg.mxu0
        %v508 = vmul.f32 %v401, 0.5
        %v509 = vmul.f32 %v403, 0.5
        %v510 = vmul.f32 %v401, %v401
        %v511 = vmul.f32 %v403, %v403
        %v512 = vmul.f32 %v510, 0.044715
        %v513 = vmul.f32 %v511, 0.044715
        %v514 = vmul.f32 %v512, %v401
        %v515 = vmul.f32 %v513, %v403
        %v516 = vadd.f32 %v401, %v514
        %v517 = vadd.f32 %v403, %v515
        %v518 = vmul.f32 %v516, 0.7978846
        %v519 = vmul.f32 %v517, 0.7978846
        %v520 = vtanh.pop %v518
        %v521 = vtanh.pop %v519
        %v522 = vadd.f32 %v520, 1.0
        %v523 = vadd.f32 %v521, 1.0
        %v524 = vmul.f32 %v508, %v522
        %v525 = vmul.f32 %v509, %v523
        %v526 = vmul.f32 %v524, %v504
        %v527 = vmul.f32 %v525, %v506
        %v528 = vld [vmem:[#allocation2] sm:$0xff]
        %v529 = vld [vmem:[#allocation9] sm:$0xff]
        %v530 = vld [vmem:[#allocation9 + $0x8] sm:$0xff]
        %v531 = vld [vmem:[#allocation9 + $0x10] sm:$0xff]
        %v532 = vld [vmem:[#allocation9 + $0x18] sm:$0xff]
        %v533 = vld [vmem:[#allocation9 + $0x20] sm:$0xff]
        %v534 = vld [vmem:[#allocation9 + $0x28] sm:$0xff]
        %v535 = vld [vmem:[#allocation9 + $0x30] sm:$0xff]
        %v536 = vld [vmem:[#allocation9 + $0x38] sm:$0xff]
        %v537 = vld [vmem:[#allocation9 + $0x40] sm:$0xff]
        %v538 = vld [vmem:[#allocation9 + $0x48] sm:$0xff]
        %v539 = vld [vmem:[#allocation9 + $0x50] sm:$0xff]
        %v540 = vld [vmem:[#allocation9 + $0x58] sm:$0xff]
        %v541 = vld [vmem:[#allocation9 + $0x60] sm:$0xff]
        %v542 = vld [vmem:[#allocation9 + $0x68] sm:$0xff]
        %v543 = vld [vmem:[#allocation9 + $0x70] sm:$0xff]
        %v544 = vld [vmem:[#allocation9 + $0x78] sm:$0xff]
        %v545 = vld [vmem:[#allocation9 + $0x80] sm:$0xff]
        %v546 = vld [vmem:[#allocation9 + $0x88] sm:$0xff]
        %v547 = vld [vmem:[#allocation9 + $0x90] sm:$0xff]
        %v548 = vld [vmem:[#allocation9 + $0x98] sm:$0xff]
        %v549 = vld [vmem:[#allocation9 + $0xa0] sm:$0xff]
        %v550 = vld [vmem:[#allocation9 + $0xa8] sm:$0xff]
        %v551 = vld [vmem:[#allocation9 + $0xb0] sm:$0xff]
        %v552 = vld [vmem:[#allocation9 + $0xb8] sm:$0xff]
        %v553 = vld [vmem:[#allocation9 + $0xc0] sm:$0xff]
        %v554 = vld [vmem:[#allocation9 + $0xc8] sm:$0xff]
        %v555 = vld [vmem:[#allocation9 + $0xd0] sm:$0xff]
        %v556 = vld [vmem:[#allocation9 + $0xd8] sm:$0xff]
        %v557 = vld [vmem:[#allocation9 + $0xe0] sm:$0xff]
        %v558 = vld [vmem:[#allocation9 + $0xe8] sm:$0xff]
        %v559 = vld [vmem:[#allocation9 + $0xf0] sm:$0xff]
        %v560 = vld [vmem:[#allocation9 + $0xf8] sm:$0xff]
        %561 = vmatprep.subr.mxu0 0.0
        %562 = vmatpush1.msra.mxu0 %v529
        %563 = vmatprep.subr.mxu0 0.0
        %564 = vmatpush1.msra.mxu0 %v530
        %565 = vmatprep.subr.mxu0 0.0
        %566 = vmatpush1.msra.mxu0 %v531
        %567 = vmatprep.subr.mxu0 0.0
        %568 = vmatpush1.msra.mxu0 %v532
        %569 = vmatprep.subr.mxu0 0.0
        %570 = vmatpush1.msra.mxu0 %v533
        %571 = vmatprep.subr.mxu0 0.0
        %572 = vmatpush1.msra.mxu0 %v534
        %573 = vmatprep.subr.mxu0 0.0
        %574 = vmatpush1.msra.mxu0 %v535
        %575 = vmatprep.subr.mxu0 0.0
        %576 = vmatpush1.msra.mxu0 %v536
        %577 = vmatprep.subr.mxu0 0.0
        %578 = vmatpush1.msra.mxu0 %v537
        %579 = vmatprep.subr.mxu0 0.0
        %580 = vmatpush1.msra.mxu0 %v538
        %581 = vmatprep.subr.mxu0 0.0
        %582 = vmatpush1.msra.mxu0 %v539
        %583 = vmatprep.subr.mxu0 0.0
        %584 = vmatpush1.msra.mxu0 %v540
        %585 = vmatprep.subr.mxu0 0.0
        %586 = vmatpush1.msra.mxu0 %v541
        %587 = vmatprep.subr.mxu0 0.0
        %588 = vmatpush1.msra.mxu0 %v542
        %589 = vmatprep.subr.mxu0 0.0
        %590 = vmatpush1.msra.mxu0 %v543
        %591 = vmatprep.subr.mxu0 0.0
        %592 = vmatpush1.msra.mxu0 %v544
        %593 = vmatprep.subr.mxu0 0.0
        %594 = vmatpush1.msra.mxu0 %v545
        %595 = vmatprep.subr.mxu0 0.0
        %596 = vmatpush1.msra.mxu0 %v546
        %597 = vmatprep.subr.mxu0 0.0
        %598 = vmatpush1.msra.mxu0 %v547
        %599 = vmatprep.subr.mxu0 0.0
        %600 = vmatpush1.msra.mxu0 %v548
        %601 = vmatprep.subr.mxu0 0.0
        %602 = vmatpush1.msra.mxu0 %v549
        %603 = vmatprep.subr.mxu0 0.0
        %604 = vmatpush1.msra.mxu0 %v550
        %605 = vmatprep.subr.mxu0 0.0
        %606 = vmatpush1.msra.mxu0 %v551
        %607 = vmatprep.subr.mxu0 0.0
        %608 = vmatpush1.msra.mxu0 %v552
        %609 = vmatprep.subr.mxu0 0.0
        %610 = vmatpush1.msra.mxu0 %v553
        %611 = vmatprep.subr.mxu0 0.0
        %612 = vmatpush1.msra.mxu0 %v554
        %613 = vmatprep.subr.mxu0 0.0
        %614 = vmatpush1.msra.mxu0 %v555
        %615 = vmatprep.subr.mxu0 0.0
        %616 = vmatpush1.msra.mxu0 %v556
        %617 = vmatprep.subr.mxu0 0.0
        %618 = vmatpush1.msra.mxu0 %v557
        %619 = vmatprep.subr.mxu0 0.0
        %620 = vmatpush1.msra.mxu0 %v558
        %621 = vmatprep.subr.mxu0 0.0
        %622 = vmatpush1.msra.mxu0 %v559
        %623 = vmatprep.subr.mxu0 0.0
        %624 = vmatpush1.msra.mxu0 %v560
        %625 = vmatprep.mubr.f32.mxu0 %v527
        %626 = vmatmul.mubr.f32.gmra.mrb[0].mxu0 %v526
        %v627 = vpop.f32.mrb[0].mxu0
        %v628 = vadd.f32 0.0, %v627
        %v629 = vpop.f32.mrb[0].mxu0
        %630 = vdwg.mxu0
        %v631 = vadd.f32 %v528, %v628
        %p632 = scmp.lt.s32.totalorder %s28, 0
        // Predicated region
        $region57: #{gemma_mlp.1} parent=35 // pred_check
          %p633 = pneg %p632
        $region58: #{gemma_mlp.1} parent=35 // pred_check_branch
          %635 = sbr.rel (%p633) target = $region60
        $region59: #{gemma_mlp.1} parent=35 // pred_region
          %636 = vst [vmem:[#allocation2] sm:$0xff] %v631
        $region60: #{gemma_mlp.1} parent=35 // pred_fallthru
          _
        // Predicated region
        $region61: #{gemma_mlp.1} parent=35 // pred_check
          %p637 = pneg %p296
        $region62: #{gemma_mlp.1} parent=35 // pred_check_branch
          %639 = sbr.rel (%p637) target = $region64
        $region63: #{gemma_mlp.1} parent=35 // pred_region
          %640 = vst [vmem:[%s292] sm:$0xff] %v631
        $region64: #{gemma_mlp.1} parent=35 // pred_fallthru
          _
        %s641 = sand.u32 %s147, 1
        %s642 = scalar_lea.sflag [#allocation5], %s641
        %s643 = sand.u32 %s147, 1
        %s644 = smul.addr %s643, 8
        %s645 = scalar_lea.vmem [#allocation11], %s644
        // Predicated region
        $region65: #{gemma_mlp.1} parent=35 // pred_check
          %p646 = pneg %p157
        $region66: #{gemma_mlp.1} parent=35 // pred_check_branch
          %648 = sbr.rel (%p646) target = $region68
        $region67: #{gemma_mlp.1} parent=35 // pred_region
          %s650 = ssub.s32 128, 128
          %651 = vsyncadd %s642, %s650
          %s652 = smul.addr %s27, 128
          %s653 = scalar_lea.hbm %s4, %s652
          %s655 = sshll.u32 %s645, 4
          %s656 = int_to_ptr.vmem [resolvable:$true] %s655
          %658 = dma.vmem_to_hbm [thread:$0]  %s656, 128, %s653, %s642
        $region68: #{gemma_mlp.1} parent=35 // pred_fallthru
          _
      $region36: #{gemma_mlp.1} parent=5 // pred_fallthru
        _
      %p659 = scmp.le.s32.totalorder 2, %s18
      // Predicated region
      $region69: #{gemma_mlp.1} parent=5 // pred_check
        %p660 = pneg %p659
      $region70: #{gemma_mlp.1} parent=5 // pred_check_branch
        %662 = sbr.rel (%p660) target = $region72
      $region71: #{gemma_mlp.1} parent=5 // pred_region
        %s663 = ssub.s32 %s18, 2
        // Predicated region
        $region73: #{gemma_mlp.1} parent=71 // pred_check
          %p664 = pneg %p163
        $region74: #{gemma_mlp.1} parent=71 // pred_check_branch
          %666 = sbr.rel (%p664) target = $region76
        $region75: #{gemma_mlp.1} parent=71 // pred_region
          %s667 = sand.u32 %s148, 1
          %s668 = scalar_lea.sflag [#allocation5], %s667
          %s669 = sand.u32 %s148, 1
          %s670 = smul.addr %s669, 8
          %s671 = scalar_lea.vmem [#allocation11], %s670
          %672 = dma.done %s668, 128
        $region76: #{gemma_mlp.1} parent=71 // pred_fallthru
          _
      $region72: #{gemma_mlp.1} parent=5 // pred_fallthru
        _
    $region6: #{gemma_mlp.1} parent=1 // loop_footer
      %s22 = sadd.s32 1, %s18
    $region7: #{gemma_mlp.1} parent=1 // loop_footer_branch
      %17 = sbr.rel target = $region3
    $region8: #{gemma_mlp.1} parent=1 // loop_exit
      _
    %673 = vsyncpa [#allocation4], 1
    %s674 = scalar_lea.sflag [#allocation4], 1
    %675 = vsyncpa %s674, 1
    %676 = vsyncpa [#allocation7], 1
    %677 = vsyncpa [#allocation10], 1
    %678 = vsyncpa [#allocation5], 1
    %s679 = scalar_lea.sflag [#allocation5], 1
    %680 = vsyncpa %s679, 1

</llo_original>
